<compile_context>
chip_gen: v5e
topology: v5e:2x2
jax: 0.10.0
libtpu: 0.0.40
codegen_flags: <defaults>
</compile_context>

<pallas_src>
import jax
import jax.numpy as jnp
import numpy as np
from jax.experimental import pallas as pl
from jax.experimental.pallas import tpu as pltpu


_INV_SQRT2 = 0.7071067811865476


def _gelu_exact(x):
    """Exact (erf-based) GELU matching PyTorch nn.GELU() default.

    erf via Abramowitz & Stegun 7.1.26 (max abs error ~1.5e-7).  The exp()
    goes to the EUP (its own VLIW slot); the short polynomial is VPU filler
    under a memory-bound kernel.
    """
    z = x * _INV_SQRT2
    a = jnp.abs(z)
    t = 1.0 / (1.0 + 0.3275911 * a)
    poly = t * (0.254829592 + t * (-0.284496736 + t * (1.421413741
                + t * (-1.453152027 + t * 1.061405429))))
    erf_abs = 1.0 - poly * jnp.exp(-a * a)
    erf = jnp.where(z < 0.0, -erf_abs, erf_abs)
    return 0.5 * x * (1.0 + erf)


def _small_block_v3_kernel(x_ref, inj_ref, w_ref, b_ref, o_ref):
    # h = x @ W^T + b + injection ;  out = GELU(h)   (all fused, one tile)
    h = jnp.dot(x_ref[...], w_ref[...], preferred_element_type=jnp.float32)
    h = h + b_ref[...] + inj_ref[...]
    o_ref[...] = _gelu_exact(h).astype(o_ref.dtype)


def small_block_v3_forward(x, injection, w1, b1, *, block_b=256):
    """Fused SmallBlock_V3.forward.

    x, injection : (..., D) float32 activations (any leading dims, like nn.Linear)
    w1           : (D, D) conv1 weight in PyTorch layout (out_features, in_features)
    b1           : (D,)   conv1 bias
    """
    D = x.shape[-1]
    lead_shape = x.shape[:-1]

    # Flatten leading dims -> a single batch axis (Linear acts on last dim).
    x2 = x.reshape(-1, D)
    inj2 = injection.reshape(-1, D)
    B = x2.shape[0]

    tb = min(block_b, B)                 # rows per grid step
    n_b = pl.cdiv(B, tb)
    Bp = n_b * tb
    if Bp != B:
        # Pad batch so it tiles evenly; when more than one tile is needed
        # tb == block_b (a multiple of 8), so the (8,128) rule is satisfied.
        pad = ((0, Bp - B), (0, 0))
        x2 = jnp.pad(x2, pad)
        inj2 = jnp.pad(inj2, pad)

    w1_t = w1.T                          # (in, out) so the kernel does x @ W^T
    b1 = b1.reshape(1, D)                # (1, D) for sublane broadcast

    out = pl.pallas_call(
        _small_block_v3_kernel,
        out_shape=jax.ShapeDtypeStruct((Bp, D), x.dtype),
        grid=(n_b,),
        in_specs=[
            pl.BlockSpec((tb, D), lambda i: (i, 0)),   # x tile (streamed)
            pl.BlockSpec((tb, D), lambda i: (i, 0)),   # injection tile (streamed)
            pl.BlockSpec((D, D), lambda i: (0, 0)),    # weight: VMEM-resident
            pl.BlockSpec((1, D), lambda i: (0, 0)),    # bias:   VMEM-resident
        ],
        out_specs=pl.BlockSpec((tb, D), lambda i: (i, 0)),
        compiler_params=pltpu.CompilerParams(
            dimension_semantics=("parallel",)),        # megacore on v7x
    )(x2, inj2, w1_t, b1)

    out = out[:B] if Bp != B else out
    return out.reshape(*lead_shape, D)


def reference_forward(x, injection, w1, b1):
    """Pure-JAX reference of SmallBlock_V3.forward (exact GELU)."""
    h = x @ w1.T + b1 + injection
    return jax.nn.gelu(h, approximate=False)


if __name__ == "__main__":
    out_dim = 128     # lane-dense feature dim (multiple of 128)
    batch = 64

    key = jax.random.PRNGKey(0)
    k_x, k_inj, k_w, k_b = jax.random.split(key, 4)

    # nn.Linear default init bounds; weight in PyTorch (out, in) layout.
    bound = 1.0 / np.sqrt(out_dim)
    w1 = jax.random.uniform(k_w, (out_dim, out_dim), jnp.float32, -bound, bound)
    b1 = jax.random.uniform(k_b, (out_dim,), jnp.float32, -bound, bound)

    x = jax.random.normal(k_x, (batch, out_dim), jnp.float32)
    inj = jax.random.normal(k_inj, (batch, out_dim), jnp.float32)

    # block_b=32 -> grid=(2,) to exercise the tiled / parallel path.
    out = small_block_v3_forward(x, inj, w1, b1, block_b=32)
    out = jax.block_until_ready(out)

    ref = reference_forward(x, inj, w1, b1)
    np.testing.assert_allclose(np.asarray(out), np.asarray(ref),
                               rtol=5e-5, atol=5e-5)
    print("KERNEL_OK")
</pallas_src>

<mosaic_0001>
module attributes {stable_mosaic.version = 11 : i64} {
  func.func @_small_block_v3_kernel(%arg0: i32, %arg1: memref<32x128xf32, #tpu.memory_space<vmem>>, %arg2: memref<32x128xf32, #tpu.memory_space<vmem>>, %arg3: memref<128x128xf32, #tpu.memory_space<vmem>>, %arg4: memref<1x128xf32, #tpu.memory_space<vmem>>, %arg5: memref<32x128xf32, #tpu.memory_space<vmem>>) attributes {dimension_semantics = [#tpu.dimension_semantics<parallel>], iteration_bounds = array<i64: 2>, scalar_prefetch = 0 : i64, scratch_operands = 0 : i64, tpu.core_type = #tpu.core_type<tc>, window_params = [{transform_indices = @transform_0, window_bounds = array<i64: 32, 128>}, {transform_indices = @transform_1, window_bounds = array<i64: 32, 128>}, {pipeline_mode = #tpu.pipeline_mode<synchronous>, transform_indices = @transform_2, window_bounds = array<i64: 128, 128>}, {pipeline_mode = #tpu.pipeline_mode<synchronous>, transform_indices = @transform_3, window_bounds = array<i64: 1, 128>}, {transform_indices = @transform_4, window_bounds = array<i64: 32, 128>}]} {
    %c0 = arith.constant 0 : index
    %c0_0 = arith.constant 0 : index
    %0 = vector.load %arg1[%c0, %c0_0] : memref<32x128xf32, #tpu.memory_space<vmem>>, vector<32x128xf32>
    %c0_1 = arith.constant 0 : index
    %c0_2 = arith.constant 0 : index
    %1 = vector.load %arg3[%c0_1, %c0_2] : memref<128x128xf32, #tpu.memory_space<vmem>>, vector<128x128xf32>
    %cst = arith.constant dense<0.000000e+00> : vector<32x128xf32>
    %2 = tpu.matmul %0, %1, %cst {dimension_numbers = #tpu.dot_dimension_numbers<[1], [0], [0], [1], [0, 0, 1, 1], [], []>} : vector<32x128xf32>, vector<128x128xf32>, vector<32x128xf32> -> vector<32x128xf32>
    %c0_3 = arith.constant 0 : index
    %c0_4 = arith.constant 0 : index
    %3 = vector.load %arg4[%c0_3, %c0_4] : memref<1x128xf32, #tpu.memory_space<vmem>>, vector<1x128xf32>
    %4 = vector.broadcast %3 : vector<1x128xf32> to vector<32x128xf32>
    %5 = arith.addf %2, %4 : vector<32x128xf32>
    %c0_5 = arith.constant 0 : index
    %c0_6 = arith.constant 0 : index
    %6 = vector.load %arg2[%c0_5, %c0_6] : memref<32x128xf32, #tpu.memory_space<vmem>>, vector<32x128xf32>
    %7 = arith.addf %5, %6 : vector<32x128xf32>
    %cst_7 = arith.constant 0.707106769 : f32
    %8 = vector.broadcast %cst_7 : f32 to vector<32x128xf32>
    %9 = arith.mulf %7, %8 : vector<32x128xf32>
    %10 = math.absf %9 : vector<32x128xf32>
    %cst_8 = arith.constant 0.327591091 : f32
    %11 = vector.broadcast %cst_8 : f32 to vector<32x128xf32>
    %12 = arith.mulf %11, %10 : vector<32x128xf32>
    %cst_9 = arith.constant 1.000000e+00 : f32
    %13 = vector.broadcast %cst_9 : f32 to vector<32x128xf32>
    %14 = arith.addf %13, %12 : vector<32x128xf32>
    %cst_10 = arith.constant 1.000000e+00 : f32
    %15 = vector.broadcast %cst_10 : f32 to vector<32x128xf32>
    %16 = arith.divf %15, %14 : vector<32x128xf32>
    %cst_11 = arith.constant 1.06140542 : f32
    %17 = vector.broadcast %cst_11 : f32 to vector<32x128xf32>
    %18 = arith.mulf %16, %17 : vector<32x128xf32>
    %cst_12 = arith.constant -1.45315206 : f32
    %19 = vector.broadcast %cst_12 : f32 to vector<32x128xf32>
    %20 = arith.addf %19, %18 : vector<32x128xf32>
    %21 = arith.mulf %16, %20 : vector<32x128xf32>
    %cst_13 = arith.constant 1.42141378 : f32
    %22 = vector.broadcast %cst_13 : f32 to vector<32x128xf32>
    %23 = arith.addf %22, %21 : vector<32x128xf32>
    %24 = arith.mulf %16, %23 : vector<32x128xf32>
    %cst_14 = arith.constant -0.284496725 : f32
    %25 = vector.broadcast %cst_14 : f32 to vector<32x128xf32>
    %26 = arith.addf %25, %24 : vector<32x128xf32>
    %27 = arith.mulf %16, %26 : vector<32x128xf32>
    %cst_15 = arith.constant 0.254829586 : f32
    %28 = vector.broadcast %cst_15 : f32 to vector<32x128xf32>
    %29 = arith.addf %28, %27 : vector<32x128xf32>
    %30 = arith.mulf %16, %29 : vector<32x128xf32>
    %cst_16 = arith.constant 0.000000e+00 : f32
    %31 = vector.broadcast %cst_16 : f32 to vector<32x128xf32>
    %32 = arith.subf %31, %10 : vector<32x128xf32>
    %33 = arith.mulf %32, %10 : vector<32x128xf32>
    %34 = math.exp %33 : vector<32x128xf32>
    %35 = arith.mulf %30, %34 : vector<32x128xf32>
    %cst_17 = arith.constant 1.000000e+00 : f32
    %36 = vector.broadcast %cst_17 : f32 to vector<32x128xf32>
    %37 = arith.subf %36, %35 : vector<32x128xf32>
    %cst_18 = arith.constant 0.000000e+00 : f32
    %38 = vector.broadcast %cst_18 : f32 to vector<32x128xf32>
    %39 = arith.cmpf olt, %9, %38 : vector<32x128xf32>
    %cst_19 = arith.constant 0.000000e+00 : f32
    %40 = vector.broadcast %cst_19 : f32 to vector<32x128xf32>
    %41 = arith.subf %40, %37 : vector<32x128xf32>
    %42 = arith.select %39, %41, %37 : vector<32x128xi1>, vector<32x128xf32>
    %cst_20 = arith.constant 5.000000e-01 : f32
    %43 = vector.broadcast %cst_20 : f32 to vector<32x128xf32>
    %44 = arith.mulf %43, %7 : vector<32x128xf32>
    %cst_21 = arith.constant 1.000000e+00 : f32
    %45 = vector.broadcast %cst_21 : f32 to vector<32x128xf32>
    %46 = arith.addf %45, %42 : vector<32x128xf32>
    %47 = arith.mulf %44, %46 : vector<32x128xf32>
    %c0_22 = arith.constant 0 : index
    %c0_23 = arith.constant 0 : index
    %48 = vector.load %arg5[%c0_22, %c0_23] : memref<32x128xf32, #tpu.memory_space<vmem>>, vector<32x128xf32>
    tpu.vector_store %arg5[%c0_22, %c0_23], %47 {strides = array<i32>} : memref<32x128xf32, #tpu.memory_space<vmem>>, vector<32x128xf32>,
    return
  }
  func.func @transform_0(%arg0: i32) -> (i32, i32) {
    %c0_i32 = arith.constant 0 : i32
    %c0_i32_0 = arith.constant 0 : i32
    return %arg0, %c0_i32 : i32, i32
  }
  func.func @transform_1(%arg0: i32) -> (i32, i32) {
    %c0_i32 = arith.constant 0 : i32
    %c0_i32_0 = arith.constant 0 : i32
    return %arg0, %c0_i32 : i32, i32
  }
  func.func @transform_2(%arg0: i32) -> (i32, i32) {
    %c0_i32 = arith.constant 0 : i32
    %c0_i32_0 = arith.constant 0 : i32
    %c0_i32_1 = arith.constant 0 : i32
    return %c0_i32, %c0_i32_0 : i32, i32
  }
  func.func @transform_3(%arg0: i32) -> (i32, i32) {
    %c0_i32 = arith.constant 0 : i32
    %c0_i32_0 = arith.constant 0 : i32
    %c0_i32_1 = arith.constant 0 : i32
    return %c0_i32, %c0_i32_0 : i32, i32
  }
  func.func @transform_4(%arg0: i32) -> (i32, i32) {
    %c0_i32 = arith.constant 0 : i32
    %c0_i32_0 = arith.constant 0 : i32
    return %arg0, %c0_i32 : i32, i32
  }
}

</mosaic_0001>

<llo_original>
// kernel: tpu_custom_call.1
$region0: #{tpu_custom_call.1}
  #allocation0 [shape = 'u32[]', space=smem, size = 0x4, offset = 0x4, fixed_abs, tag = 'smem constant byte address 0x4 - core index']
  #allocation1 [shape = 'u32[72,128]{1,0:T(1,128)}', space=vmem, size = 0x9000, scoped, tag = 'internal scratch']
  %s0 = inlined_call_operand.hbm [shape: f32[64,128], index: 0, kind: input, shape index: {}]
  %s1 = inlined_call_operand.hbm [shape: f32[64,128], index: 1, kind: input, shape index: {}]
  %s2 = inlined_call_operand.hbm [shape: f32[128,128], index: 2, kind: input, shape index: {}]
  %s3 = inlined_call_operand.vmem [shape: f32[1,128], index: 3, kind: input, shape index: {}]
  %s4 = inlined_call_operand.hbm [shape: f32[64,128], index: 4, kind: output, shape index: {}]
  %s5 = sld [smem:[#allocation0]]
  $region61: #{tpu_custom_call.1} parent=0
    _
  %s7 = ssub.s32 1, %s5
  %s8 = scalar_select 0, %s7, %s5
  $region1: #{tpu_custom_call.1} parent=0
    #allocation2 [shape = 'u8[32768]{0}', space=vmem, size = 0x8000, scoped, tag = 'input window, operand 0']
    #allocation3 [shape = 's32[2]{0}', space=sflag, size = 0x8, scoped, tag = 'scoped memory for tpu_custom_call.1']
    #allocation4 [shape = 's32[2]{0}', space=sflag, size = 0x8, scoped, tag = 'scoped memory for tpu_custom_call.1']
    #allocation5 [shape = 'u8[32768]{0}', space=vmem, size = 0x8000, scoped, tag = 'input window, operand 1']
    #allocation6 [shape = 's32[2]{0}', space=sflag, size = 0x8, scoped, tag = 'scoped memory for tpu_custom_call.1']
    #allocation7 [shape = 'u8[65536]{0}', space=vmem, size = 0x10000, scoped, tag = 'input window, operand 2, single buffered']
    #allocation8 [shape = 'u8[32768]{0}', space=vmem, size = 0x8000, scoped, tag = 'output window, operand 0']
    %9 = vsyncpa [#allocation3], 0
    %s10 = scalar_lea.sflag [#allocation3], 1
    %11 = vsyncpa %s10, 0
    %12 = vsyncpa [#allocation6], 0
    %s13 = scalar_lea.sflag [#allocation6], 1
    %14 = vsyncpa %s13, 0
    %15 = vsyncpa [#allocation4], 0
    %s16 = scalar_lea.sflag [#allocation4], 1
    %17 = vsyncpa %s16, 0
    loop: start=0, step=1, limit=4
    $region2: #{tpu_custom_call.1} parent=1 // loop_pre_header
      _
    $region3: #{tpu_custom_call.1} parent=1 // loop_header
      %s19 = sphi 0, %s23
      %p20 = scmp.ge.s32.totalorder %s19, 4
      %s29 = sphi 0, %s31
      %s32 = sphi 0, %s29
      %s33 = sphi 0, %s32
      %s49 = sphi 0, %s33
      %s55 = sphi 0, %s57
      %s58 = sphi 0, %s55
      %s59 = sphi 0, %s58
      %s75 = sphi 0, %s59
      %s79 = sphi 0, %s79
      %s81 = sphi 0, %s79
      %s82 = sphi 0, %s81
      %s96 = sphi 0, %s82
      %s100 = sphi 0, %s100
      %s102 = sphi 0, %s100
      %s103 = sphi 0, %s102
      %s117 = sphi 0, %s103
      %s123 = sphi 0, %s125
      %s126 = sphi 0, %s123
      %s127 = sphi 0, %s126
      %s143 = sphi 0, %s127
    $region4: #{tpu_custom_call.1} parent=1 // loop_header_branch
      %22 = sbr.rel (%p20) target = $region8
    $region5: #{tpu_custom_call.1} parent=1 // loop_body
      %s24 = ssub.s32 %s19, 1
      %s25 = ssub.s32 %s19, 2
      %s26 = sadd.s32 %s19, 1
      %s27 = ssub.s32 %s19, %s26
      %p28 = scmp.eq.s32.totalorder %s27, 0
      %s30 = sadd.s32 %s29, 1
      %s31 = scalar_select %p28, %s29, %s30
      %p34 = pneg %p28
      %p35 = scmp.eq.s32.totalorder %s19, 1
      %p36 = por %p34, %p35
      %p37 = scmp.ne.s32.totalorder %s29, %s32
      %p38 = scmp.eq.s32.totalorder %s19, 0
      %p39 = por %p37, %p38
      %p40 = scmp.ne.s32.totalorder %s29, %s32
      %p41 = scmp.eq.s32.totalorder %s24, 1
      %p42 = por %p40, %p41
      %p43 = scmp.ne.s32.totalorder %s32, %s33
      %p44 = scmp.eq.s32.totalorder %s24, 0
      %p45 = por %p43, %p44
      %p46 = scmp.ne.s32.totalorder %s32, %s33
      %p47 = scmp.eq.s32.totalorder %s25, 1
      %p48 = por %p46, %p47
      %p50 = scmp.ne.s32.totalorder %s33, %s49
      %p51 = scmp.eq.s32.totalorder %s25, 0
      %p52 = por %p50, %p51
      %s53 = ssub.s32 %s19, %s26
      %p54 = scmp.eq.s32.totalorder %s53, 0
      %s56 = sadd.s32 %s55, 1
      %s57 = scalar_select %p54, %s55, %s56
      %p60 = pneg %p54
      %p61 = scmp.eq.s32.totalorder %s19, 1
      %p62 = por %p60, %p61
      %p63 = scmp.ne.s32.totalorder %s55, %s58
      %p64 = scmp.eq.s32.totalorder %s19, 0
      %p65 = por %p63, %p64
      %p66 = scmp.ne.s32.totalorder %s55, %s58
      %p67 = scmp.eq.s32.totalorder %s24, 1
      %p68 = por %p66, %p67
      %p69 = scmp.ne.s32.totalorder %s58, %s59
      %p70 = scmp.eq.s32.totalorder %s24, 0
      %p71 = por %p69, %p70
      %p72 = scmp.ne.s32.totalorder %s58, %s59
      %p73 = scmp.eq.s32.totalorder %s25, 1
      %p74 = por %p72, %p73
      %p76 = scmp.ne.s32.totalorder %s59, %s75
      %p77 = scmp.eq.s32.totalorder %s25, 0
      %p78 = por %p76, %p77
      %s80 = sadd.s32 %s79, 1
      %p83 = scmp.eq.s32.totalorder %s19, 1
      %p84 = scmp.ne.s32.totalorder %s79, %s81
      %p85 = scmp.eq.s32.totalorder %s19, 0
      %p86 = por %p84, %p85
      %p87 = scmp.ne.s32.totalorder %s79, %s81
      %p88 = scmp.eq.s32.totalorder %s24, 1
      %p89 = por %p87, %p88
      %p90 = scmp.ne.s32.totalorder %s81, %s82
      %p91 = scmp.eq.s32.totalorder %s24, 0
      %p92 = por %p90, %p91
      %p93 = scmp.ne.s32.totalorder %s81, %s82
      %p94 = scmp.eq.s32.totalorder %s25, 1
      %p95 = por %p93, %p94
      %p97 = scmp.ne.s32.totalorder %s82, %s96
      %p98 = scmp.eq.s32.totalorder %s25, 0
      %p99 = por %p97, %p98
      %s101 = sadd.s32 %s100, 1
      %p104 = scmp.eq.s32.totalorder %s19, 1
      %p105 = scmp.ne.s32.totalorder %s100, %s102
      %p106 = scmp.eq.s32.totalorder %s19, 0
      %p107 = por %p105, %p106
      %p108 = scmp.ne.s32.totalorder %s100, %s102
      %p109 = scmp.eq.s32.totalorder %s24, 1
      %p110 = por %p108, %p109
      %p111 = scmp.ne.s32.totalorder %s102, %s103
      %p112 = scmp.eq.s32.totalorder %s24, 0
      %p113 = por %p111, %p112
      %p114 = scmp.ne.s32.totalorder %s102, %s103
      %p115 = scmp.eq.s32.totalorder %s25, 1
      %p116 = por %p114, %p115
      %p118 = scmp.ne.s32.totalorder %s103, %s117
      %p119 = scmp.eq.s32.totalorder %s25, 0
      %p120 = por %p118, %p119
      %s121 = ssub.s32 %s19, %s26
      %p122 = scmp.eq.s32.totalorder %s121, 0
      %s124 = sadd.s32 %s123, 1
      %s125 = scalar_select %p122, %s123, %s124
      %p128 = pneg %p122
      %p129 = scmp.eq.s32.totalorder %s19, 1
      %p130 = por %p128, %p129
      %p131 = scmp.ne.s32.totalorder %s123, %s126
      %p132 = scmp.eq.s32.totalorder %s19, 0
      %p133 = por %p131, %p132
      %p134 = scmp.ne.s32.totalorder %s123, %s126
      %p135 = scmp.eq.s32.totalorder %s24, 1
      %p136 = por %p134, %p135
      %p137 = scmp.ne.s32.totalorder %s126, %s127
      %p138 = scmp.eq.s32.totalorder %s24, 0
      %p139 = por %p137, %p138
      %p140 = scmp.ne.s32.totalorder %s126, %s127
      %p141 = scmp.eq.s32.totalorder %s25, 1
      %p142 = por %p140, %p141
      %p144 = scmp.ne.s32.totalorder %s127, %s143
      %p145 = scmp.eq.s32.totalorder %s25, 0
      %p146 = por %p144, %p145
      %p147 = scmp.le.s32.totalorder 1, %s19
      %p148 = scmp.lt.s32.totalorder %s19, 3
      %p149 = pnand %p147, %p148
      %p150 = pneg %p149
      // Predicated region
      $region9: #{tpu_custom_call.1} parent=5 // pred_check
        _
      $region10: #{tpu_custom_call.1} parent=5 // pred_check_branch
        %152 = sbr.rel (%p149) target = $region12
      $region11: #{tpu_custom_call.1} parent=5 // pred_region
        %s153 = ssub.s32 %s19, 1
        // Predicated region
        $region13: #{tpu_custom_call.1} parent=11 // pred_check
          %p154 = pneg %p92
        $region14: #{tpu_custom_call.1} parent=11 // pred_check_branch
          %156 = sbr.rel (%p154) target = $region16
        $region15: #{tpu_custom_call.1} parent=11 // pred_region
          %158 = vsyncadd [#allocation6], 0
          %s159 = sshll.u32 %s2, 4
          %s160 = int_to_ptr.hbm [resolvable:$true] %s159
          %s161 = sshll.u32 [#allocation7], 4
          %s162 = int_to_ptr.vmem [resolvable:$true] %s161
          %167 = dma.hbm_to_vmem [thread:$0]  %s160, 2048, %s162, [#allocation6], 128, 128, 8
        $region16: #{tpu_custom_call.1} parent=11 // pred_fallthru
          _
        // Predicated region
        $region17: #{tpu_custom_call.1} parent=11 // pred_check
          %p168 = pneg %p113
        $region18: #{tpu_custom_call.1} parent=11 // pred_check_branch
          %170 = sbr.rel (%p168) target = $region20
        $region19: #{tpu_custom_call.1} parent=11 // pred_region
          _
        $region20: #{tpu_custom_call.1} parent=11 // pred_fallthru
          _
      $region12: #{tpu_custom_call.1} parent=5 // pred_fallthru
        _
      %p171 = scmp.lt.s32.totalorder %s19, 2
      // Predicated region
      $region21: #{tpu_custom_call.1} parent=5 // pred_check
        %p172 = pneg %p171
      $region22: #{tpu_custom_call.1} parent=5 // pred_check_branch
        %174 = sbr.rel (%p172) target = $region24
      $region23: #{tpu_custom_call.1} parent=5 // pred_region
        // Predicated region
        $region25: #{tpu_custom_call.1} parent=23 // pred_check
          %p175 = pneg %p39
        $region26: #{tpu_custom_call.1} parent=23 // pred_check_branch
          %177 = sbr.rel (%p175) target = $region28
        $region27: #{tpu_custom_call.1} parent=23 // pred_region
          %s178 = sand.u32 %s29, 1
          %s179 = scalar_lea.sflag [#allocation3], %s178
          %s180 = sand.u32 %s29, 1
          %s181 = smul.addr %s180, 32
          %s182 = scalar_lea.vmem [#allocation2], %s181
          %s183 = smul.u32 4, %s19
          %185 = vsyncadd %s179, 0
          %s186 = smul.addr %s183, 8
          %s187 = scalar_lea.hbm %s0, %s186
          %s188 = sshll.u32 %s187, 4
          %s189 = int_to_ptr.hbm [resolvable:$true] %s188
          %s190 = sshll.u32 %s182, 4
          %s191 = int_to_ptr.vmem [resolvable:$true] %s190
          %196 = dma.hbm_to_vmem [thread:$0]  %s189, 512, %s191, %s179, 128, 128, 8
        $region28: #{tpu_custom_call.1} parent=23 // pred_fallthru
          _
        // Predicated region
        $region29: #{tpu_custom_call.1} parent=23 // pred_check
          %p197 = pneg %p65
        $region30: #{tpu_custom_call.1} parent=23 // pred_check_branch
          %199 = sbr.rel (%p197) target = $region32
        $region31: #{tpu_custom_call.1} parent=23 // pred_region
          %s200 = sand.u32 %s19, 1
          %s201 = scalar_lea.sflag [#allocation6], %s200
          %s202 = sand.u32 %s55, 1
          %s203 = smul.addr %s202, 32
          %s204 = scalar_lea.vmem [#allocation5], %s203
          %s205 = smul.u32 4, %s19
          %207 = vsyncadd %s201, 0
          %s208 = smul.addr %s205, 8
          %s209 = scalar_lea.hbm %s1, %s208
          %s210 = sshll.u32 %s209, 4
          %s211 = int_to_ptr.hbm [resolvable:$true] %s210
          %s212 = sshll.u32 %s204, 4
          %s213 = int_to_ptr.vmem [resolvable:$true] %s212
          %218 = dma.hbm_to_vmem [thread:$0]  %s211, 512, %s213, %s201, 128, 128, 8
        $region32: #{tpu_custom_call.1} parent=23 // pred_fallthru
          _
      $region24: #{tpu_custom_call.1} parent=5 // pred_fallthru
        _
      %p219 = scmp.le.s32.totalorder 1, %s19
      %p220 = scmp.lt.s32.totalorder %s19, 3
      %p221 = pnand %p219, %p220
      %p222 = pneg %p221
      // Predicated region
      $region33: #{tpu_custom_call.1} parent=5 // pred_check
        _
      $region34: #{tpu_custom_call.1} parent=5 // pred_check_branch
        %224 = sbr.rel (%p221) target = $region36
      $region35: #{tpu_custom_call.1} parent=5 // pred_region
        %s225 = ssub.s32 %s19, 1
        %s226 = sand.u32 %s32, 1
        %s227 = scalar_lea.sflag [#allocation3], %s226
        %s228 = sand.u32 %s32, 1
        %s229 = smul.addr %s228, 32
        %s230 = scalar_lea.vmem [#allocation2], %s229
        // Predicated region
        $region37: #{tpu_custom_call.1} parent=35 // pred_check
          %p231 = pneg %p45
        $region38: #{tpu_custom_call.1} parent=35 // pred_check_branch
          %233 = sbr.rel (%p231) target = $region40
        $region39: #{tpu_custom_call.1} parent=35 // pred_region
          %235 = dma.done %s227, 512
        $region40: #{tpu_custom_call.1} parent=35 // pred_fallthru
          _
        %s236 = sand.u32 %s24, 1
        %s237 = scalar_lea.sflag [#allocation6], %s236
        %s238 = sand.u32 %s58, 1
        %s239 = smul.addr %s238, 32
        %s240 = scalar_lea.vmem [#allocation5], %s239
        // Predicated region
        $region41: #{tpu_custom_call.1} parent=35 // pred_check
          %p241 = pneg %p71
        $region42: #{tpu_custom_call.1} parent=35 // pred_check_branch
          %243 = sbr.rel (%p241) target = $region44
        $region43: #{tpu_custom_call.1} parent=35 // pred_region
          %245 = dma.done %s237, 512
        $region44: #{tpu_custom_call.1} parent=35 // pred_fallthru
          _
        // Predicated region
        $region45: #{tpu_custom_call.1} parent=35 // pred_check
          %p246 = pneg %p92
        $region46: #{tpu_custom_call.1} parent=35 // pred_check_branch
          %248 = sbr.rel (%p246) target = $region48
        $region47: #{tpu_custom_call.1} parent=35 // pred_region
          %250 = dma.done [#allocation6], 2048
        $region48: #{tpu_custom_call.1} parent=35 // pred_fallthru
          _
        %s251 = sand.u32 %s32, 1
        %s252 = scalar_lea.sflag [#allocation3], %s251
        %s253 = sand.u32 %s32, 1
        %s254 = smul.addr %s253, 32
        %s255 = scalar_lea.vmem [#allocation2], %s254
        %p256 = pneg %p45
        %p257 = pneg %p42
        %s258 = sand.u32 %s24, 1
        %s259 = scalar_lea.sflag [#allocation6], %s258
        %s260 = sand.u32 %s58, 1
        %s261 = smul.addr %s260, 32
        %s262 = scalar_lea.vmem [#allocation5], %s261
        %p263 = pneg %p71
        %p264 = pneg %p68
        %p265 = pneg %p92
        %p266 = pneg %p89
        %p267 = pneg %p113
        %p268 = pneg %p110
        %p269 = pneg %p139
        %p270 = pneg %p136
        %s271 = sand.u32 %s126, 1
        %s272 = scalar_lea.sflag [#allocation4], %s271
        %s273 = sand.u32 %s126, 1
        %s274 = smul.addr %s273, 32
        %s275 = scalar_lea.vmem [#allocation8], %s274
        %s276 = smul.u32 4, %s24
        %s277 = smul.u32 4, %s24
        %s278 = smul.u32 4, %s24
        %v279 = vld [vmem:[%s230] sm:$0xff]
        %v280 = vld [vmem:[%s230 + $0x8] sm:$0xff]
        %v281 = vld [vmem:[%s230 + $0x10] sm:$0xff]
        %v282 = vld [vmem:[%s230 + $0x18] sm:$0xff]
        %v283 = vld [vmem:[#allocation7] sm:$0xff]
        %v284 = vld [vmem:[#allocation7 + $0x8] sm:$0xff]
        %v285 = vld [vmem:[#allocation7 + $0x10] sm:$0xff]
        %v286 = vld [vmem:[#allocation7 + $0x18] sm:$0xff]
        %v287 = vld [vmem:[#allocation7 + $0x20] sm:$0xff]
        %v288 = vld [vmem:[#allocation7 + $0x28] sm:$0xff]
        %v289 = vld [vmem:[#allocation7 + $0x30] sm:$0xff]
        %v290 = vld [vmem:[#allocation7 + $0x38] sm:$0xff]
        %v291 = vld [vmem:[#allocation7 + $0x40] sm:$0xff]
        %v292 = vld [vmem:[#allocation7 + $0x48] sm:$0xff]
        %v293 = vld [vmem:[#allocation7 + $0x50] sm:$0xff]
        %v294 = vld [vmem:[#allocation7 + $0x58] sm:$0xff]
        %v295 = vld [vmem:[#allocation7 + $0x60] sm:$0xff]
        %v296 = vld [vmem:[#allocation7 + $0x68] sm:$0xff]
        %v297 = vld [vmem:[#allocation7 + $0x70] sm:$0xff]
        %v298 = vld [vmem:[#allocation7 + $0x78] sm:$0xff]
        %v299 = vld [vmem:[%s3] sm:$0x1]
        %v301 = vperm.slane %v299, 0
        %303 = vmatpush.msra.mxu0 %v298
        %304 = vmatpush.msra.mxu0 %v297
        %305 = vmatpush.msra.mxu0 %v296
        %306 = vmatpush.msra.mxu0 %v295
        %307 = vmatpush.msra.mxu0 %v294
        %308 = vmatpush.msra.mxu0 %v293
        %309 = vmatpush.msra.mxu0 %v292
        %310 = vmatpush.msra.mxu0 %v291
        %311 = vmatpush.msra.mxu0 %v290
        %312 = vmatpush.msra.mxu0 %v289
        %313 = vmatpush.msra.mxu0 %v288
        %314 = vmatpush.msra.mxu0 %v287
        %315 = vmatpush.msra.mxu0 %v286
        %316 = vmatpush.msra.mxu0 %v285
        %317 = vmatpush.msra.mxu0 %v284
        %318 = vmatpush.msra.mxu0 %v283
        %319 = vmatmul.f32.gmra.mxu0 %v279
        %v320 = vpop.f32.mrf.mxu0
        %v321 = vadd.f32 %v301, %v320
        %322 = vmatmul.f32.gmra.mxu0 %v280
        %v323 = vpop.f32.mrf.mxu0
        %v324 = vadd.f32 %v301, %v323
        %325 = vmatmul.f32.gmra.mxu0 %v281
        %v326 = vpop.f32.mrf.mxu0
        %v327 = vadd.f32 %v301, %v326
        %328 = vmatmul.f32.gmra.mxu0 %v282
        %v329 = vpop.f32.mrf.mxu0
        %v330 = vadd.f32 %v301, %v329
        %331 = vdwg.mxu0
        %v332 = vld [vmem:[%s240] sm:$0xff]
        %v333 = vld [vmem:[%s240 + $0x8] sm:$0xff]
        %v334 = vld [vmem:[%s240 + $0x10] sm:$0xff]
        %v335 = vld [vmem:[%s240 + $0x18] sm:$0xff]
        %v336 = vadd.f32 %v321, %v332
        %v337 = vadd.f32 %v324, %v333
        %v338 = vadd.f32 %v327, %v334
        %v339 = vadd.f32 %v330, %v335
        %v340 = vmul.f32 %v336, 0.70710677
        %v341 = vmul.f32 %v337, 0.70710677
        %v342 = vmul.f32 %v338, 0.70710677
        %v343 = vmul.f32 %v339, 0.70710677
        %v344 = vand.u32 2147483647, %v340
        %v345 = vand.u32 2147483647, %v341
        %v346 = vand.u32 2147483647, %v342
        %v347 = vand.u32 2147483647, %v343
        %v348 = vmul.f32 %v344, 0.3275911
        %v349 = vmul.f32 %v345, 0.3275911
        %v350 = vmul.f32 %v346, 0.3275911
        %v351 = vmul.f32 %v347, 0.3275911
        %v352 = vadd.f32 %v348, 1.0
        %v353 = vadd.f32 %v349, 1.0
        %v354 = vadd.f32 %v350, 1.0
        %v355 = vadd.f32 %v351, 1.0
        %v356 = vrcp.pop %v352
        %v357 = vmul.f32 %v352, %v356
        %v358 = vsub.f32 1.0, %v357
        %v359 = vmul.f32 %v356, %v358
        %v360 = vadd.f32 %v356, %v359
        %vm361 = vweird.f32 %v352
        %vm362 = vweird.f32 %v356
        %vm363 = vmor %vm361, %vm362
        %v364 = vsel %vm363, %v356, %v360
        %v365 = vand.u32 2147483647, %v352
        %vm366 = vcmp.eq.f32.partialorder %v365, 8.507059e+37
        %v367 = vand.u32 %v352, 2147483648
        %v368 = vor.u32 1.1754944e-38, %v367
        %v369 = vsel %vm366, %v368, %v364
        %v370 = vmul.f32 1.0, %v369
        %v371 = vrcp.pop %v353
        %v372 = vmul.f32 %v353, %v371
        %v373 = vsub.f32 1.0, %v372
        %v374 = vmul.f32 %v371, %v373
        %v375 = vadd.f32 %v371, %v374
        %vm376 = vweird.f32 %v353
        %vm377 = vweird.f32 %v371
        %vm378 = vmor %vm376, %vm377
        %v379 = vsel %vm378, %v371, %v375
        %v380 = vand.u32 2147483647, %v353
        %vm381 = vcmp.eq.f32.partialorder %v380, 8.507059e+37
        %v382 = vand.u32 %v353, 2147483648
        %v383 = vor.u32 1.1754944e-38, %v382
        %v384 = vsel %vm381, %v383, %v379
        %v385 = vmul.f32 1.0, %v384
        %v386 = vrcp.pop %v354
        %v387 = vmul.f32 %v354, %v386
        %v388 = vsub.f32 1.0, %v387
        %v389 = vmul.f32 %v386, %v388
        %v390 = vadd.f32 %v386, %v389
        %vm391 = vweird.f32 %v354
        %vm392 = vweird.f32 %v386
        %vm393 = vmor %vm391, %vm392
        %v394 = vsel %vm393, %v386, %v390
        %v395 = vand.u32 2147483647, %v354
        %vm396 = vcmp.eq.f32.partialorder %v395, 8.507059e+37
        %v397 = vand.u32 %v354, 2147483648
        %v398 = vor.u32 1.1754944e-38, %v397
        %v399 = vsel %vm396, %v398, %v394
        %v400 = vmul.f32 1.0, %v399
        %v401 = vrcp.pop %v355
        %v402 = vmul.f32 %v355, %v401
        %v403 = vsub.f32 1.0, %v402
        %v404 = vmul.f32 %v401, %v403
        %v405 = vadd.f32 %v401, %v404
        %vm406 = vweird.f32 %v355
        %vm407 = vweird.f32 %v401
        %vm408 = vmor %vm406, %vm407
        %v409 = vsel %vm408, %v401, %v405
        %v410 = vand.u32 2147483647, %v355
        %vm411 = vcmp.eq.f32.partialorder %v410, 8.507059e+37
        %v412 = vand.u32 %v355, 2147483648
        %v413 = vor.u32 1.1754944e-38, %v412
        %v414 = vsel %vm411, %v413, %v409
        %v415 = vmul.f32 1.0, %v414
        %v416 = vmul.f32 %v370, 1.0614054
        %v417 = vmul.f32 %v385, 1.0614054
        %v418 = vmul.f32 %v400, 1.0614054
        %v419 = vmul.f32 %v415, 1.0614054
        %v420 = vadd.f32 %v416, -1.4531521
        %v421 = vadd.f32 %v417, -1.4531521
        %v422 = vadd.f32 %v418, -1.4531521
        %v423 = vadd.f32 %v419, -1.4531521
        %v424 = vmul.f32 %v370, %v420
        %v425 = vmul.f32 %v385, %v421
        %v426 = vmul.f32 %v400, %v422
        %v427 = vmul.f32 %v415, %v423
        %v428 = vadd.f32 %v424, 1.4214138
        %v429 = vadd.f32 %v425, 1.4214138
        %v430 = vadd.f32 %v426, 1.4214138
        %v431 = vadd.f32 %v427, 1.4214138
        %v432 = vmul.f32 %v370, %v428
        %v433 = vmul.f32 %v385, %v429
        %v434 = vmul.f32 %v400, %v430
        %v435 = vmul.f32 %v415, %v431
        %v436 = vadd.f32 %v432, -0.28449672
        %v437 = vadd.f32 %v433, -0.28449672
        %v438 = vadd.f32 %v434, -0.28449672
        %v439 = vadd.f32 %v435, -0.28449672
        %v440 = vmul.f32 %v370, %v436
        %v441 = vmul.f32 %v385, %v437
        %v442 = vmul.f32 %v400, %v438
        %v443 = vmul.f32 %v415, %v439
        %v444 = vadd.f32 %v440, 0.2548296
        %v445 = vadd.f32 %v441, 0.2548296
        %v446 = vadd.f32 %v442, 0.2548296
        %v447 = vadd.f32 %v443, 0.2548296
        %v448 = vmul.f32 %v370, %v444
        %v449 = vmul.f32 %v385, %v445
        %v450 = vmul.f32 %v400, %v446
        %v451 = vmul.f32 %v415, %v447
        %v452 = vsub.f32 0.0, %v344
        %v453 = vsub.f32 0.0, %v345
        %v454 = vsub.f32 0.0, %v346
        %v455 = vsub.f32 0.0, %v347
        %v456 = vmul.f32 %v452, %v344
        %v457 = vmul.f32 %v453, %v345
        %v458 = vmul.f32 %v454, %v346
        %v459 = vmul.f32 %v455, %v347
        %v460 = vmul.f32 %v456, 1.442695
        %v461 = vpow.pop %v460
        %v462 = vmul.f32 %v457, 1.442695
        %v463 = vpow.pop %v462
        %v464 = vmul.f32 %v458, 1.442695
        %v465 = vpow.pop %v464
        %v466 = vmul.f32 %v459, 1.442695
        %v467 = vpow.pop %v466
        %v468 = vmul.f32 %v448, %v461
        %v469 = vmul.f32 %v449, %v463
        %v470 = vmul.f32 %v450, %v465
        %v471 = vmul.f32 %v451, %v467
        %v472 = vsub.f32 1.0, %v468
        %v473 = vsub.f32 1.0, %v469
        %v474 = vsub.f32 1.0, %v470
        %v475 = vsub.f32 1.0, %v471
        %vm476 = vcmp.lt.f32.partialorder %v340, 0.0
        %vm477 = vcmp.lt.f32.partialorder %v341, 0.0
        %vm478 = vcmp.lt.f32.partialorder %v342, 0.0
        %vm479 = vcmp.lt.f32.partialorder %v343, 0.0
        %v480 = vsub.f32 0.0, %v472
        %v481 = vsub.f32 0.0, %v473
        %v482 = vsub.f32 0.0, %v474
        %v483 = vsub.f32 0.0, %v475
        %v484 = vsel %vm476, %v480, %v472
        %v485 = vsel %vm477, %v481, %v473
        %v486 = vsel %vm478, %v482, %v474
        %v487 = vsel %vm479, %v483, %v475
        %v488 = vmul.f32 %v336, 0.5
        %v489 = vmul.f32 %v337, 0.5
        %v490 = vmul.f32 %v338, 0.5
        %v491 = vmul.f32 %v339, 0.5
        %v492 = vadd.f32 %v484, 1.0
        %v493 = vadd.f32 %v485, 1.0
        %v494 = vadd.f32 %v486, 1.0
        %v495 = vadd.f32 %v487, 1.0
        %v496 = vmul.f32 %v488, %v492
        %v497 = vmul.f32 %v489, %v493
        %v498 = vmul.f32 %v490, %v494
        %v499 = vmul.f32 %v491, %v495
        %500 = vst [vmem:[%s275] sm:$0xff] %v496
        %501 = vst [vmem:[%s275 + $0x8] sm:$0xff] %v497
        %502 = vst [vmem:[%s275 + $0x10] sm:$0xff] %v498
        %503 = vst [vmem:[%s275 + $0x18] sm:$0xff] %v499
        %s504 = sand.u32 %s126, 1
        %s505 = scalar_lea.sflag [#allocation4], %s504
        %s506 = sand.u32 %s126, 1
        %s507 = smul.addr %s506, 32
        %s508 = scalar_lea.vmem [#allocation8], %s507
        // Predicated region
        $region49: #{tpu_custom_call.1} parent=35 // pred_check
          %p509 = pneg %p136
        $region50: #{tpu_custom_call.1} parent=35 // pred_check_branch
          %511 = sbr.rel (%p509) target = $region52
        $region51: #{tpu_custom_call.1} parent=35 // pred_region
          %s512 = smul.u32 4, %s24
          %514 = vsyncadd %s505, 0
          %s515 = smul.addr %s512, 8
          %s516 = scalar_lea.hbm %s4, %s515
          %s517 = sshll.u32 %s508, 4
          %s518 = int_to_ptr.vmem [resolvable:$true] %s517
          %s519 = sshll.u32 %s516, 4
          %s520 = int_to_ptr.hbm [resolvable:$true] %s519
          %525 = dma.vmem_to_hbm [thread:$0]  %s518, 512, %s520, %s505, 128, 128, 8
        $region52: #{tpu_custom_call.1} parent=35 // pred_fallthru
          _
      $region36: #{tpu_custom_call.1} parent=5 // pred_fallthru
        _
      %p526 = scmp.le.s32.totalorder 2, %s19
      // Predicated region
      $region53: #{tpu_custom_call.1} parent=5 // pred_check
        %p527 = pneg %p526
      $region54: #{tpu_custom_call.1} parent=5 // pred_check_branch
        %529 = sbr.rel (%p527) target = $region56
      $region55: #{tpu_custom_call.1} parent=5 // pred_region
        %s530 = ssub.s32 %s19, 2
        // Predicated region
        $region57: #{tpu_custom_call.1} parent=55 // pred_check
          %p531 = pneg %p142
        $region58: #{tpu_custom_call.1} parent=55 // pred_check_branch
          %533 = sbr.rel (%p531) target = $region60
        $region59: #{tpu_custom_call.1} parent=55 // pred_region
          %s534 = sand.u32 %s127, 1
          %s535 = scalar_lea.sflag [#allocation4], %s534
          %s536 = sand.u32 %s127, 1
          %s537 = smul.addr %s536, 32
          %s538 = scalar_lea.vmem [#allocation8], %s537
          %540 = dma.done %s535, 512
        $region60: #{tpu_custom_call.1} parent=55 // pred_fallthru
          _
      $region56: #{tpu_custom_call.1} parent=5 // pred_fallthru
        _
    $region6: #{tpu_custom_call.1} parent=1 // loop_footer
      %s23 = sadd.s32 1, %s19
    $region7: #{tpu_custom_call.1} parent=1 // loop_footer_branch
      %18 = sbr.rel target = $region3
    $region8: #{tpu_custom_call.1} parent=1 // loop_exit
      _
    %541 = vsyncpa [#allocation3], 1
    %s542 = scalar_lea.sflag [#allocation3], 1
    %543 = vsyncpa %s542, 1
    %544 = vsyncpa [#allocation6], 1
    %s545 = scalar_lea.sflag [#allocation6], 1
    %546 = vsyncpa %s545, 1
    %547 = vsyncpa [#allocation4], 1
    %s548 = scalar_lea.sflag [#allocation4], 1
    %549 = vsyncpa %s548, 1

</llo_original>
